<compile_context>
chip_gen: v7x
topology: tpu7x:2x2x1
jax: 0.10.0
libtpu: 0.0.40
codegen_flags: <defaults>
</compile_context>

<pallas_src>
import jax
import jax.numpy as jnp
from jax.experimental import pallas as pl
from jax.experimental.pallas import tpu as pltpu


def _round_up(n: int, m: int) -> int:
    return ((n + m - 1) // m) * m


def mlp_head_kernel(x_ref, w1_ref, b1_ref, w2_ref, b2_ref, w3_ref, b3_ref, out_ref):
    """One batch tile: 3x (bf16 matmul on MXU, f32 accumulate, bias + ReLU)."""
    x = x_ref[...]  # (TB, F_p) bf16

    h = jnp.dot(x, w1_ref[...], preferred_element_type=jnp.float32) + b1_ref[...]
    h = jnp.maximum(h, 0.0)

    h = jnp.dot(h.astype(jnp.bfloat16), w2_ref[...],
                preferred_element_type=jnp.float32) + b2_ref[...]
    h = jnp.maximum(h, 0.0)

    h = jnp.dot(h.astype(jnp.bfloat16), w3_ref[...],
                preferred_element_type=jnp.float32) + b3_ref[...]
    h = jnp.maximum(h, 0.0)

    out_ref[...] = h.astype(out_ref.dtype)   # lane-dense (TB, 128) store


def multilayer_classifier_head(x, params, *, tb_max=256):
    """params = (w1_t, b1, w2_t, b2, w3_t, b3); w*_t shape (in, out), b* shape (1, out), f32."""
    B = x.shape[0]
    x_flat = x.reshape(B, -1)                        # x.view(shape[0], -1)
    F = x_flat.shape[1]
    w1, b1, w2, b2, w3, b3 = params
    H1, H2, OUT = w1.shape[1], w2.shape[1], w3.shape[1]

    # Lane-dense padded dims (zeros -> results unchanged for the real rows/cols).
    F_p = _round_up(F, 128)
    H1_p = _round_up(H1, 128)     # 300 -> 384
    H2_p = _round_up(H2, 128)     # 300 -> 384
    OUT_p = _round_up(OUT, 128)   # 2   -> 128

    # Batch tiling: TB divisible by 8, bounded by tb_max; pad B up to a multiple of TB.
    TB = min(tb_max, _round_up(B, 8))
    B_p = _round_up(B, TB)

    # Zero-padded bf16 operands (halves DMA/VMEM traffic, feeds MXU bf16 path).
    xp = jnp.zeros((B_p, F_p), jnp.bfloat16).at[:B, :F].set(x_flat.astype(jnp.bfloat16))
    w1p = jnp.zeros((F_p, H1_p), jnp.bfloat16).at[:F, :H1].set(w1.astype(jnp.bfloat16))
    w2p = jnp.zeros((H1_p, H2_p), jnp.bfloat16).at[:H1, :H2].set(w2.astype(jnp.bfloat16))
    w3p = jnp.zeros((H2_p, OUT_p), jnp.bfloat16).at[:H2, :OUT].set(w3.astype(jnp.bfloat16))
    b1p = jnp.zeros((1, H1_p), jnp.float32).at[:, :H1].set(b1.astype(jnp.float32))
    b2p = jnp.zeros((1, H2_p), jnp.float32).at[:, :H2].set(b2.astype(jnp.float32))
    b3p = jnp.zeros((1, OUT_p), jnp.float32).at[:, :OUT].set(b3.astype(jnp.float32))

    const = lambda i: (0, 0)  # weights/biases resident across all grid iterations

    out_padded = pl.pallas_call(
        mlp_head_kernel,
        out_shape=jax.ShapeDtypeStruct((B_p, OUT_p), jnp.float32),
        grid_spec=pltpu.PrefetchScalarGridSpec(
            num_scalar_prefetch=0,
            grid=(B_p // TB,),
            in_specs=[
                pl.BlockSpec((TB, F_p), lambda i: (i, 0)),   # x tile streams/pipelines
                pl.BlockSpec((F_p, H1_p), const),
                pl.BlockSpec((1, H1_p), const),
                pl.BlockSpec((H1_p, H2_p), const),
                pl.BlockSpec((1, H2_p), const),
                pl.BlockSpec((H2_p, OUT_p), const),
                pl.BlockSpec((1, OUT_p), const),
            ],
            out_specs=pl.BlockSpec((TB, OUT_p), lambda i: (i, 0)),
        ),
        compiler_params=pltpu.CompilerParams(
            dimension_semantics=("parallel",),
        ),
    )(xp, w1p, b1p, w2p, b2p, w3p, b3p)

    # Slice off batch padding and output-lane padding.
    return out_padded[:B, :OUT].astype(x.dtype)


def init_params(key, input_dim, output=2, neurons=(300, 300, 300), dtype=jnp.float32):
    """Deterministic init mimicking torch.nn.Linear: U(-1/sqrt(fan_in), 1/sqrt(fan_in))."""
    dims_in = [input_dim, neurons[0], neurons[1]]
    dims_out = [neurons[0], neurons[1], output]
    params = []
    for d_in, d_out in zip(dims_in, dims_out):
        key, kw, kb = jax.random.split(key, 3)
        bound = 1.0 / (d_in ** 0.5)
        w_t = jax.random.uniform(kw, (d_in, d_out), dtype, minval=-bound, maxval=bound)
        b = jax.random.uniform(kb, (1, d_out), dtype, minval=-bound, maxval=bound)
        params.extend([w_t, b])
    return tuple(params)


def reference_forward(x, params):
    """Pure-JAX f32 reference of the PyTorch forward (eval mode)."""
    B = x.shape[0]
    h = x.reshape(B, -1)
    w1, b1, w2, b2, w3, b3 = params
    h = jnp.maximum(h @ w1 + b1, 0.0)
    h = jnp.maximum(h @ w2 + b2, 0.0)
    h = jnp.maximum(h @ w3 + b3, 0.0)
    return h


if __name__ == "__main__":
    key = jax.random.PRNGKey(0)
    k_x, k_p = jax.random.split(key)

    # Small example input: (batch=2, channels=4, seq=16) -> flattened feature dim 64.
    x = jax.random.normal(k_x, (2, 4, 16), dtype=jnp.float32)
    input_dim = 4 * 16

    params = init_params(k_p, input_dim, output=2, neurons=(300, 300, 300))

    out = multilayer_classifier_head(x, params)
    out = jax.block_until_ready(out)

    ref = reference_forward(x, params)
    assert out.shape == (2, 2), out.shape
    # bf16 MXU operands with f32 accumulation vs pure-f32 reference -> loosened tolerance.
    assert jnp.allclose(out, ref, atol=3e-2, rtol=3e-2), "mismatch vs reference"

    print("KERNEL_OK")
</pallas_src>

<mosaic_0001>
module attributes {stable_mosaic.version = 11 : i64} {
  func.func @mlp_head_kernel(%arg0: i32, %arg1: memref<8x128xbf16, #tpu.memory_space<vmem>>, %arg2: memref<128x384xbf16, #tpu.memory_space<vmem>>, %arg3: memref<1x384xf32, #tpu.memory_space<vmem>>, %arg4: memref<384x384xbf16, #tpu.memory_space<vmem>>, %arg5: memref<1x384xf32, #tpu.memory_space<vmem>>, %arg6: memref<384x128xbf16, #tpu.memory_space<vmem>>, %arg7: memref<1x128xf32, #tpu.memory_space<vmem>>, %arg8: memref<8x128xf32, #tpu.memory_space<vmem>>) attributes {dimension_semantics = [#tpu.dimension_semantics<parallel>], iteration_bounds = array<i64: 1>, scalar_prefetch = 0 : i64, scratch_operands = 0 : i64, tpu.core_type = #tpu.core_type<tc>, window_params = [{transform_indices = @transform_0, window_bounds = array<i64: 8, 128>}, {pipeline_mode = #tpu.pipeline_mode<synchronous>, transform_indices = @transform_1, window_bounds = array<i64: 128, 384>}, {pipeline_mode = #tpu.pipeline_mode<synchronous>, transform_indices = @transform_2, window_bounds = array<i64: 1, 384>}, {pipeline_mode = #tpu.pipeline_mode<synchronous>, transform_indices = @transform_3, window_bounds = array<i64: 384, 384>}, {pipeline_mode = #tpu.pipeline_mode<synchronous>, transform_indices = @transform_4, window_bounds = array<i64: 1, 384>}, {pipeline_mode = #tpu.pipeline_mode<synchronous>, transform_indices = @transform_5, window_bounds = array<i64: 384, 128>}, {pipeline_mode = #tpu.pipeline_mode<synchronous>, transform_indices = @transform_6, window_bounds = array<i64: 1, 128>}, {transform_indices = @transform_7, window_bounds = array<i64: 8, 128>}]} {
    %c0 = arith.constant 0 : index
    %c0_0 = arith.constant 0 : index
    %0 = vector.load %arg1[%c0, %c0_0] : memref<8x128xbf16, #tpu.memory_space<vmem>>, vector<8x128xbf16>
    %c0_1 = arith.constant 0 : index
    %c0_2 = arith.constant 0 : index
    %1 = vector.load %arg2[%c0_1, %c0_2] : memref<128x384xbf16, #tpu.memory_space<vmem>>, vector<128x384xbf16>
    %cst = arith.constant dense<0.000000e+00> : vector<8x384xf32>
    %2 = tpu.matmul %0, %1, %cst {dimension_numbers = #tpu.dot_dimension_numbers<[1], [0], [0], [1], [0, 0, 1, 1], [], []>} : vector<8x128xbf16>, vector<128x384xbf16>, vector<8x384xf32> -> vector<8x384xf32>
    %c0_3 = arith.constant 0 : index
    %c0_4 = arith.constant 0 : index
    %3 = vector.load %arg3[%c0_3, %c0_4] : memref<1x384xf32, #tpu.memory_space<vmem>>, vector<1x384xf32>
    %4 = vector.broadcast %3 : vector<1x384xf32> to vector<8x384xf32>
    %5 = arith.addf %2, %4 : vector<8x384xf32>
    %cst_5 = arith.constant 0.000000e+00 : f32
    %6 = vector.broadcast %cst_5 : f32 to vector<8x384xf32>
    %7 = arith.maximumf %5, %6 : vector<8x384xf32>
    %8 = arith.truncf %7 : vector<8x384xf32> to vector<8x384xbf16>
    %c0_6 = arith.constant 0 : index
    %c0_7 = arith.constant 0 : index
    %9 = vector.load %arg4[%c0_6, %c0_7] : memref<384x384xbf16, #tpu.memory_space<vmem>>, vector<384x384xbf16>
    %cst_8 = arith.constant dense<0.000000e+00> : vector<8x384xf32>
    %10 = tpu.matmul %8, %9, %cst_8 {dimension_numbers = #tpu.dot_dimension_numbers<[1], [0], [0], [1], [0, 0, 1, 1], [], []>} : vector<8x384xbf16>, vector<384x384xbf16>, vector<8x384xf32> -> vector<8x384xf32>
    %c0_9 = arith.constant 0 : index
    %c0_10 = arith.constant 0 : index
    %11 = vector.load %arg5[%c0_9, %c0_10] : memref<1x384xf32, #tpu.memory_space<vmem>>, vector<1x384xf32>
    %12 = vector.broadcast %11 : vector<1x384xf32> to vector<8x384xf32>
    %13 = arith.addf %10, %12 : vector<8x384xf32>
    %cst_11 = arith.constant 0.000000e+00 : f32
    %14 = vector.broadcast %cst_11 : f32 to vector<8x384xf32>
    %15 = arith.maximumf %13, %14 : vector<8x384xf32>
    %16 = arith.truncf %15 : vector<8x384xf32> to vector<8x384xbf16>
    %c0_12 = arith.constant 0 : index
    %c0_13 = arith.constant 0 : index
    %17 = vector.load %arg6[%c0_12, %c0_13] : memref<384x128xbf16, #tpu.memory_space<vmem>>, vector<384x128xbf16>
    %cst_14 = arith.constant dense<0.000000e+00> : vector<8x128xf32>
    %18 = tpu.matmul %16, %17, %cst_14 {dimension_numbers = #tpu.dot_dimension_numbers<[1], [0], [0], [1], [0, 0, 1, 1], [], []>} : vector<8x384xbf16>, vector<384x128xbf16>, vector<8x128xf32> -> vector<8x128xf32>
    %c0_15 = arith.constant 0 : index
    %c0_16 = arith.constant 0 : index
    %19 = vector.load %arg7[%c0_15, %c0_16] : memref<1x128xf32, #tpu.memory_space<vmem>>, vector<1x128xf32>
    %20 = vector.broadcast %19 : vector<1x128xf32> to vector<8x128xf32>
    %21 = arith.addf %18, %20 : vector<8x128xf32>
    %cst_17 = arith.constant 0.000000e+00 : f32
    %22 = vector.broadcast %cst_17 : f32 to vector<8x128xf32>
    %23 = arith.maximumf %21, %22 : vector<8x128xf32>
    %c0_18 = arith.constant 0 : index
    %c0_19 = arith.constant 0 : index
    %24 = vector.load %arg8[%c0_18, %c0_19] : memref<8x128xf32, #tpu.memory_space<vmem>>, vector<8x128xf32>
    tpu.vector_store %arg8[%c0_18, %c0_19], %23 {strides = array<i32>} : memref<8x128xf32, #tpu.memory_space<vmem>>, vector<8x128xf32>,
    return
  }
  func.func @transform_0(%arg0: i32) -> (i32, i32) {
    %c0_i32 = arith.constant 0 : i32
    %c0_i32_0 = arith.constant 0 : i32
    return %arg0, %c0_i32 : i32, i32
  }
  func.func @transform_1(%arg0: i32) -> (i32, i32) {
    %c0_i32 = arith.constant 0 : i32
    %c0_i32_0 = arith.constant 0 : i32
    %c0_i32_1 = arith.constant 0 : i32
    return %c0_i32, %c0_i32_0 : i32, i32
  }
  func.func @transform_2(%arg0: i32) -> (i32, i32) {
    %c0_i32 = arith.constant 0 : i32
    %c0_i32_0 = arith.constant 0 : i32
    %c0_i32_1 = arith.constant 0 : i32
    return %c0_i32, %c0_i32_0 : i32, i32
  }
  func.func @transform_3(%arg0: i32) -> (i32, i32) {
    %c0_i32 = arith.constant 0 : i32
    %c0_i32_0 = arith.constant 0 : i32
    %c0_i32_1 = arith.constant 0 : i32
    return %c0_i32, %c0_i32_0 : i32, i32
  }
  func.func @transform_4(%arg0: i32) -> (i32, i32) {
    %c0_i32 = arith.constant 0 : i32
    %c0_i32_0 = arith.constant 0 : i32
    %c0_i32_1 = arith.constant 0 : i32
    return %c0_i32, %c0_i32_0 : i32, i32
  }
  func.func @transform_5(%arg0: i32) -> (i32, i32) {
    %c0_i32 = arith.constant 0 : i32
    %c0_i32_0 = arith.constant 0 : i32
    %c0_i32_1 = arith.constant 0 : i32
    return %c0_i32, %c0_i32_0 : i32, i32
  }
  func.func @transform_6(%arg0: i32) -> (i32, i32) {
    %c0_i32 = arith.constant 0 : i32
    %c0_i32_0 = arith.constant 0 : i32
    %c0_i32_1 = arith.constant 0 : i32
    return %c0_i32, %c0_i32_0 : i32, i32
  }
  func.func @transform_7(%arg0: i32) -> (i32, i32) {
    %c0_i32 = arith.constant 0 : i32
    %c0_i32_0 = arith.constant 0 : i32
    return %arg0, %c0_i32 : i32, i32
  }
}

</mosaic_0001>

<llo_original>
// kernel: tpu_custom_call.1
$region0: #{tpu_custom_call.1}
  #allocation0 [shape = 'u32[]', space=smem, size = 0x4, offset = 0x4, fixed_abs, tag = 'smem constant byte address 0x4 - core index']
  #allocation1 [shape = 'u32[144,128]{1,0:T(1,128)}', space=vmem, size = 0x12000, scoped, tag = 'internal scratch']
  %s0 = inlined_call_operand.hbm [shape: bf16[8,128], index: 0, kind: input, shape index: {}]
  %s1 = inlined_call_operand.hbm [shape: bf16[128,384], index: 1, kind: input, shape index: {}]
  %s2 = inlined_call_operand.vmem [shape: f32[1,384], index: 2, kind: input, shape index: {}]
  %s3 = inlined_call_operand.hbm [shape: bf16[384,384], index: 3, kind: input, shape index: {}]
  %s4 = inlined_call_operand.vmem [shape: f32[1,384], index: 4, kind: input, shape index: {}]
  %s5 = inlined_call_operand.hbm [shape: bf16[384,128], index: 5, kind: input, shape index: {}]
  %s6 = inlined_call_operand.vmem [shape: f32[1,128], index: 6, kind: input, shape index: {}]
  %s7 = inlined_call_operand.hbm [shape: f32[8,128], index: 7, kind: output, shape index: {}]
  %s8 = sld [smem:[#allocation0]]
  $region54: #{tpu_custom_call.1} parent=0
    _
  %s10 = ssub.s32 1, %s8
  %s11 = scalar_select 0, %s10, %s8
  $region1: #{tpu_custom_call.1} parent=0
    #allocation2 [shape = 'u8[2048]{0}', space=vmem, size = 0x800, scoped, tag = 'input window, operand 0, single buffered']
    #allocation3 [shape = 's32[1]{0}', space=sflag, size = 0x4, scoped, tag = 'scoped memory for tpu_custom_call.1']
    #allocation4 [shape = 's32[1]{0}', space=sflag, size = 0x4, scoped, tag = 'scoped memory for tpu_custom_call.1']
    #allocation5 [shape = 'u8[98304]{0}', space=vmem, size = 0x18000, scoped, tag = 'input window, operand 1, single buffered']
    #allocation6 [shape = 's32[1]{0}', space=sflag, size = 0x4, scoped, tag = 'scoped memory for tpu_custom_call.1']
    #allocation7 [shape = 'u8[294912]{0}', space=vmem, size = 0x48000, scoped, tag = 'input window, operand 3, single buffered']
    #allocation8 [shape = 'u8[98304]{0}', space=vmem, size = 0x18000, scoped, tag = 'input window, operand 5, single buffered']
    #allocation9 [shape = 's32[1]{0}', space=sflag, size = 0x4, scoped, tag = 'scoped memory for tpu_custom_call.1']
    #allocation10 [shape = 'u8[4096]{0}', space=vmem, size = 0x1000, scoped, tag = 'output window, operand 0, single buffered']
    %12 = vsyncpa [#allocation3], 0
    %13 = vsyncpa [#allocation6], 0
    %14 = vsyncpa [#allocation9], 0
    %15 = vsyncpa [#allocation4], 0
    // Predicated region
    $region2: #{tpu_custom_call.1} parent=1 // pred_check
      _
    $region3: #{tpu_custom_call.1} parent=1 // pred_check_branch
      %17 = sbr.rel (0) target = $region5
    $region4: #{tpu_custom_call.1} parent=1 // pred_region
      %s19 = ssub.s32 64, 64
      %20 = vsyncadd [#allocation3], %s19
      %s22 = sshll.u32 [#allocation2], 4
      %s23 = int_to_ptr.vmem [resolvable:$true] %s22
      %25 = dma.hbm_to_vmem [thread:$0]  %s0, 64, %s23, [#allocation3]
    $region5: #{tpu_custom_call.1} parent=1 // pred_fallthru
      _
    // Predicated region
    $region6: #{tpu_custom_call.1} parent=1 // pred_check
      _
    $region7: #{tpu_custom_call.1} parent=1 // pred_check_branch
      %27 = sbr.rel (0) target = $region9
    $region8: #{tpu_custom_call.1} parent=1 // pred_region
      %s29 = ssub.s32 3072, 3072
      %30 = vsyncadd [#allocation6], %s29
      %s31 = sshll.u32 [#allocation5], 4
      %s32 = int_to_ptr.vmem [resolvable:$true] %s31
      %37 = dma.hbm_to_vmem [thread:$0]  %s1, 3072, %s32, [#allocation6], 192, 192, 12
    $region9: #{tpu_custom_call.1} parent=1 // pred_fallthru
      _
    // Predicated region
    $region10: #{tpu_custom_call.1} parent=1 // pred_check
      _
    $region11: #{tpu_custom_call.1} parent=1 // pred_check_branch
      %39 = sbr.rel (0) target = $region13
    $region12: #{tpu_custom_call.1} parent=1 // pred_region
      _
    $region13: #{tpu_custom_call.1} parent=1 // pred_fallthru
      _
    // Predicated region
    $region14: #{tpu_custom_call.1} parent=1 // pred_check
      _
    $region15: #{tpu_custom_call.1} parent=1 // pred_check_branch
      %41 = sbr.rel (0) target = $region17
    $region16: #{tpu_custom_call.1} parent=1 // pred_region
      %s43 = ssub.s32 9216, 9216
      %44 = vsyncadd [#allocation6], %s43
      %s45 = sshll.u32 [#allocation7], 4
      %s46 = int_to_ptr.vmem [resolvable:$true] %s45
      %51 = dma.hbm_to_vmem [thread:$0]  %s3, 9216, %s46, [#allocation6], 192, 192, 12
    $region17: #{tpu_custom_call.1} parent=1 // pred_fallthru
      _
    // Predicated region
    $region18: #{tpu_custom_call.1} parent=1 // pred_check
      _
    $region19: #{tpu_custom_call.1} parent=1 // pred_check_branch
      %53 = sbr.rel (0) target = $region21
    $region20: #{tpu_custom_call.1} parent=1 // pred_region
      _
    $region21: #{tpu_custom_call.1} parent=1 // pred_fallthru
      _
    // Predicated region
    $region22: #{tpu_custom_call.1} parent=1 // pred_check
      _
    $region23: #{tpu_custom_call.1} parent=1 // pred_check_branch
      %55 = sbr.rel (0) target = $region25
    $region24: #{tpu_custom_call.1} parent=1 // pred_region
      %s57 = ssub.s32 3072, 3072
      %58 = vsyncadd [#allocation9], %s57
      %s59 = sshll.u32 [#allocation8], 4
      %s60 = int_to_ptr.vmem [resolvable:$true] %s59
      %65 = dma.hbm_to_vmem [thread:$0]  %s5, 3072, %s60, [#allocation9], 64, 64, 4
    $region25: #{tpu_custom_call.1} parent=1 // pred_fallthru
      _
    // Predicated region
    $region26: #{tpu_custom_call.1} parent=1 // pred_check
      _
    $region27: #{tpu_custom_call.1} parent=1 // pred_check_branch
      %67 = sbr.rel (0) target = $region29
    $region28: #{tpu_custom_call.1} parent=1 // pred_region
      _
    $region29: #{tpu_custom_call.1} parent=1 // pred_fallthru
      _
    // Predicated region
    $region30: #{tpu_custom_call.1} parent=1 // pred_check
      _
    $region31: #{tpu_custom_call.1} parent=1 // pred_check_branch
      %69 = sbr.rel (0) target = $region33
    $region32: #{tpu_custom_call.1} parent=1 // pred_region
      %70 = dma.done [#allocation3], 64
    $region33: #{tpu_custom_call.1} parent=1 // pred_fallthru
      _
    // Predicated region
    $region34: #{tpu_custom_call.1} parent=1 // pred_check
      _
    $region35: #{tpu_custom_call.1} parent=1 // pred_check_branch
      %72 = sbr.rel (0) target = $region37
    $region36: #{tpu_custom_call.1} parent=1 // pred_region
      %73 = dma.done [#allocation6], 3072
    $region37: #{tpu_custom_call.1} parent=1 // pred_fallthru
      _
    // Predicated region
    $region38: #{tpu_custom_call.1} parent=1 // pred_check
      _
    $region39: #{tpu_custom_call.1} parent=1 // pred_check_branch
      %75 = sbr.rel (0) target = $region41
    $region40: #{tpu_custom_call.1} parent=1 // pred_region
      %76 = dma.done [#allocation6], 9216
    $region41: #{tpu_custom_call.1} parent=1 // pred_fallthru
      _
    // Predicated region
    $region42: #{tpu_custom_call.1} parent=1 // pred_check
      _
    $region43: #{tpu_custom_call.1} parent=1 // pred_check_branch
      %78 = sbr.rel (0) target = $region45
    $region44: #{tpu_custom_call.1} parent=1 // pred_region
      %79 = dma.done [#allocation9], 3072
    $region45: #{tpu_custom_call.1} parent=1 // pred_fallthru
      _
    %v81 = vld [vmem:[#allocation2] sm:$0xf]
    %v82 = vld [vmem:[#allocation5] sm:$0xff]
    %v83 = vld [vmem:[#allocation5 + $0x8] sm:$0xf]
    %v84 = vld [vmem:[#allocation5 + $0xc] sm:$0xff]
    %v85 = vld [vmem:[#allocation5 + $0x14] sm:$0xf]
    %v86 = vld [vmem:[#allocation5 + $0x18] sm:$0xff]
    %v87 = vld [vmem:[#allocation5 + $0x20] sm:$0xf]
    %v88 = vld [vmem:[#allocation5 + $0x24] sm:$0xff]
    %v89 = vld [vmem:[#allocation5 + $0x2c] sm:$0xf]
    %v90 = vld [vmem:[#allocation5 + $0x30] sm:$0xff]
    %v91 = vld [vmem:[#allocation5 + $0x38] sm:$0xf]
    %v92 = vld [vmem:[#allocation5 + $0x3c] sm:$0xff]
    %v93 = vld [vmem:[#allocation5 + $0x44] sm:$0xf]
    %v94 = vld [vmem:[#allocation5 + $0x48] sm:$0xff]
    %v95 = vld [vmem:[#allocation5 + $0x50] sm:$0xf]
    %v96 = vld [vmem:[#allocation5 + $0x54] sm:$0xff]
    %v97 = vld [vmem:[#allocation5 + $0x5c] sm:$0xf]
    %v98 = vld [vmem:[#allocation5 + $0x60] sm:$0xff]
    %v99 = vld [vmem:[#allocation5 + $0x68] sm:$0xf]
    %v100 = vld [vmem:[#allocation5 + $0x6c] sm:$0xff]
    %v101 = vld [vmem:[#allocation5 + $0x74] sm:$0xf]
    %v102 = vld [vmem:[#allocation5 + $0x78] sm:$0xff]
    %v103 = vld [vmem:[#allocation5 + $0x80] sm:$0xf]
    %v104 = vld [vmem:[#allocation5 + $0x84] sm:$0xff]
    %v105 = vld [vmem:[#allocation5 + $0x8c] sm:$0xf]
    %v106 = vld [vmem:[#allocation5 + $0x90] sm:$0xff]
    %v107 = vld [vmem:[#allocation5 + $0x98] sm:$0xf]
    %v108 = vld [vmem:[#allocation5 + $0x9c] sm:$0xff]
    %v109 = vld [vmem:[#allocation5 + $0xa4] sm:$0xf]
    %v110 = vld [vmem:[#allocation5 + $0xa8] sm:$0xff]
    %v111 = vld [vmem:[#allocation5 + $0xb0] sm:$0xf]
    %v112 = vld [vmem:[#allocation5 + $0xb4] sm:$0xff]
    %v113 = vld [vmem:[#allocation5 + $0xbc] sm:$0xf]
    %v114 = vld [vmem:[%s2] sm:$0x7]
    %v116 = vlaneseq
    %v117 = vshrl.u32 %v116, 7
    %v118 = vsub.s32 0, %v117
    %v119 = vrot.slane %v114, %v118
    %v120 = vlaneseq
    %v121 = vshrl.u32 %v120, 7
    %v122 = vsub.s32 1, %v121
    %v123 = vrot.slane %v114, %v122
    %v124 = vlaneseq
    %v125 = vshrl.u32 %v124, 7
    %v126 = vsub.s32 2, %v125
    %v127 = vrot.slane %v114, %v126
    %v163 = vunpack.c.l.b16 %v82
    %v164 = vunpack.c.h.b16 %v82
    %v165 = vunpack.c.l.b16 %v83
    %v166 = vunpack.c.l.b16 %v84
    %v167 = vunpack.c.h.b16 %v84
    %v168 = vunpack.c.l.b16 %v85
    %v169 = vunpack.c.l.b16 %v86
    %v170 = vunpack.c.h.b16 %v86
    %v171 = vunpack.c.l.b16 %v87
    %v172 = vunpack.c.l.b16 %v88
    %v173 = vunpack.c.h.b16 %v88
    %v174 = vunpack.c.l.b16 %v89
    %v175 = vunpack.c.l.b16 %v90
    %v176 = vunpack.c.h.b16 %v90
    %v177 = vunpack.c.l.b16 %v91
    %v178 = vunpack.c.l.b16 %v92
    %v179 = vunpack.c.h.b16 %v92
    %v180 = vunpack.c.l.b16 %v93
    %v181 = vunpack.c.l.b16 %v94
    %v182 = vunpack.c.h.b16 %v94
    %v183 = vunpack.c.l.b16 %v95
    %v184 = vunpack.c.l.b16 %v96
    %v185 = vunpack.c.h.b16 %v96
    %v186 = vunpack.c.l.b16 %v97
    %v187 = vunpack.c.l.b16 %v98
    %v188 = vunpack.c.h.b16 %v98
    %v189 = vunpack.c.l.b16 %v99
    %v190 = vunpack.c.l.b16 %v100
    %v191 = vunpack.c.h.b16 %v100
    %v192 = vunpack.c.l.b16 %v101
    %v193 = vunpack.c.l.b16 %v102
    %v194 = vunpack.c.h.b16 %v102
    %v195 = vunpack.c.l.b16 %v103
    %v196 = vunpack.c.l.b16 %v104
    %v197 = vunpack.c.h.b16 %v104
    %v198 = vunpack.c.l.b16 %v105
    %v199 = vunpack.c.l.b16 %v106
    %v200 = vunpack.c.h.b16 %v106
    %v201 = vunpack.c.l.b16 %v107
    %v202 = vunpack.c.l.b16 %v108
    %v203 = vunpack.c.h.b16 %v108
    %v204 = vunpack.c.l.b16 %v109
    %v205 = vunpack.c.l.b16 %v110
    %v206 = vunpack.c.h.b16 %v110
    %v207 = vunpack.c.l.b16 %v111
    %v208 = vunpack.c.l.b16 %v112
    %v209 = vunpack.c.h.b16 %v112
    %v210 = vunpack.c.l.b16 %v113
    %v211 = vpack.c.b16 %v166, %v163
    %v212 = vpack.c.b16 %v167, %v164
    %v213 = vpack.c.b16 %v168, %v165
    %v214 = vpack.c.b16 %v172, %v169
    %v215 = vpack.c.b16 %v173, %v170
    %v216 = vpack.c.b16 %v174, %v171
    %v217 = vpack.c.b16 %v178, %v175
    %v218 = vpack.c.b16 %v179, %v176
    %v219 = vpack.c.b16 %v180, %v177
    %v220 = vpack.c.b16 %v184, %v181
    %v221 = vpack.c.b16 %v185, %v182
    %v222 = vpack.c.b16 %v186, %v183
    %v223 = vpack.c.b16 %v190, %v187
    %v224 = vpack.c.b16 %v191, %v188
    %v225 = vpack.c.b16 %v192, %v189
    %v226 = vpack.c.b16 %v196, %v193
    %v227 = vpack.c.b16 %v197, %v194
    %v228 = vpack.c.b16 %v198, %v195
    %v229 = vpack.c.b16 %v202, %v199
    %v230 = vpack.c.b16 %v203, %v200
    %v231 = vpack.c.b16 %v204, %v201
    %v232 = vpack.c.b16 %v208, %v205
    %v233 = vpack.c.b16 %v209, %v206
    %v234 = vpack.c.b16 %v210, %v207
    %259 = vmatprep.subr.bf16.mxu0 %v212
    %260 = vmatpush1.bf16.msra.mxu0 %v211
    %261 = vmatprep.subr.bf16.mxu0 %v215
    %262 = vmatpush1.bf16.msra.mxu0 %v214
    %263 = vmatprep.subr.bf16.mxu0 %v218
    %264 = vmatpush1.bf16.msra.mxu0 %v217
    %265 = vmatprep.subr.bf16.mxu0 %v221
    %266 = vmatpush1.bf16.msra.mxu0 %v220
    %267 = vmatprep.subr.bf16.mxu0 %v224
    %268 = vmatpush1.bf16.msra.mxu0 %v223
    %269 = vmatprep.subr.bf16.mxu0 %v227
    %270 = vmatpush1.bf16.msra.mxu0 %v226
    %271 = vmatprep.subr.bf16.mxu0 %v230
    %272 = vmatpush1.bf16.msra.mxu0 %v229
    %273 = vmatprep.subr.bf16.mxu0 %v233
    %274 = vmatpush1.bf16.msra.mxu0 %v232
    %275 = vmatprep.subr.bf16.mxu0 0
    %276 = vmatpush1.bf16.msra.mxu0 0
    %277 = vmatprep.subr.bf16.mxu0 0
    %278 = vmatpush1.bf16.msra.mxu0 0
    %279 = vmatprep.subr.bf16.mxu0 0
    %280 = vmatpush1.bf16.msra.mxu0 0
    %281 = vmatprep.subr.bf16.mxu0 0
    %282 = vmatpush1.bf16.msra.mxu0 0
    %283 = vmatprep.subr.bf16.mxu0 0
    %284 = vmatpush1.bf16.msra.mxu0 0
    %285 = vmatprep.subr.bf16.mxu0 0
    %286 = vmatpush1.bf16.msra.mxu0 0
    %287 = vmatprep.subr.bf16.mxu0 0
    %288 = vmatpush1.bf16.msra.mxu0 0
    %289 = vmatprep.subr.bf16.mxu0 0
    %290 = vmatpush1.bf16.msra.mxu0 0
    %291 = vmatprep.mubr.bf16.mxu0 0
    %292 = vmatmul.mubr.bf16.gmra.mrb[0].mxu0 %v81
    %v293 = vpop.f32.mrb[0].mxu0
    %v294 = vadd.f32 %v119, %v293
    %v295 = vpop.f32.mrb[0].mxu0
    %v296 = vadd.f32 %v123, %v295
    %v297 = vpop.f32.mrb[0].mxu0
    %v298 = vpop.f32.mrb[0].mxu0
    %299 = vdwg.mxu0
    %300 = vmatprep.subr.bf16.mxu0 0
    %301 = vmatpush1.bf16.msra.mxu0 %v213
    %302 = vmatprep.subr.bf16.mxu0 0
    %303 = vmatpush1.bf16.msra.mxu0 %v216
    %304 = vmatprep.subr.bf16.mxu0 0
    %305 = vmatpush1.bf16.msra.mxu0 %v219
    %306 = vmatprep.subr.bf16.mxu0 0
    %307 = vmatpush1.bf16.msra.mxu0 %v222
    %308 = vmatprep.subr.bf16.mxu0 0
    %309 = vmatpush1.bf16.msra.mxu0 %v225
    %310 = vmatprep.subr.bf16.mxu0 0
    %311 = vmatpush1.bf16.msra.mxu0 %v228
    %312 = vmatprep.subr.bf16.mxu0 0
    %313 = vmatpush1.bf16.msra.mxu0 %v231
    %314 = vmatprep.subr.bf16.mxu0 0
    %315 = vmatpush1.bf16.msra.mxu0 %v234
    %316 = vmatprep.subr.bf16.mxu0 0
    %317 = vmatpush1.bf16.msra.mxu0 0
    %318 = vmatprep.subr.bf16.mxu0 0
    %319 = vmatpush1.bf16.msra.mxu0 0
    %320 = vmatprep.subr.bf16.mxu0 0
    %321 = vmatpush1.bf16.msra.mxu0 0
    %322 = vmatprep.subr.bf16.mxu0 0
    %323 = vmatpush1.bf16.msra.mxu0 0
    %324 = vmatprep.subr.bf16.mxu0 0
    %325 = vmatpush1.bf16.msra.mxu0 0
    %326 = vmatprep.subr.bf16.mxu0 0
    %327 = vmatpush1.bf16.msra.mxu0 0
    %328 = vmatprep.subr.bf16.mxu0 0
    %329 = vmatpush1.bf16.msra.mxu0 0
    %330 = vmatprep.subr.bf16.mxu0 0
    %331 = vmatpush1.bf16.msra.mxu0 0
    %332 = vmatprep.mubr.bf16.mxu0 0
    %333 = vmatmul.mubr.bf16.gmra.mrb[0].mxu0 %v81
    %v334 = vpop.f32.mrb[0].mxu0
    %v335 = vadd.f32 %v127, %v334
    %v336 = vpop.f32.mrb[0].mxu0
    %v337 = vpop.f32.mrb[0].mxu0
    %v338 = vpop.f32.mrb[0].mxu0
    %339 = vdwg.mxu0
    %v340 = vmax.f32 %v294, 0.0
    %v341 = vmax.f32 %v296, 0.0
    %v342 = vmax.f32 %v335, 0.0
    %v343 = vpack.c.bf16 %v340, %v340
    %v344 = vpack.c.bf16 %v341, %v341
    %v345 = vpack.c.bf16 %v342, %v342
    %v346 = vld [vmem:[#allocation7] sm:$0xff]
    %v347 = vld [vmem:[#allocation7 + $0x8] sm:$0xf]
    %v348 = vld [vmem:[#allocation7 + $0xc] sm:$0xff]
    %v349 = vld [vmem:[#allocation7 + $0x14] sm:$0xf]
    %v350 = vld [vmem:[#allocation7 + $0x18] sm:$0xff]
    %v351 = vld [vmem:[#allocation7 + $0x20] sm:$0xf]
    %v352 = vld [vmem:[#allocation7 + $0x24] sm:$0xff]
    %v353 = vld [vmem:[#allocation7 + $0x2c] sm:$0xf]
    %v354 = vld [vmem:[#allocation7 + $0x30] sm:$0xff]
    %v355 = vld [vmem:[#allocation7 + $0x38] sm:$0xf]
    %v356 = vld [vmem:[#allocation7 + $0x3c] sm:$0xff]
    %v357 = vld [vmem:[#allocation7 + $0x44] sm:$0xf]
    %v358 = vld [vmem:[#allocation7 + $0x48] sm:$0xff]
    %v359 = vld [vmem:[#allocation7 + $0x50] sm:$0xf]
    %v360 = vld [vmem:[#allocation7 + $0x54] sm:$0xff]
    %v361 = vld [vmem:[#allocation7 + $0x5c] sm:$0xf]
    %v362 = vld [vmem:[#allocation7 + $0x60] sm:$0xff]
    %v363 = vld [vmem:[#allocation7 + $0x68] sm:$0xf]
    %v364 = vld [vmem:[#allocation7 + $0x6c] sm:$0xff]
    %v365 = vld [vmem:[#allocation7 + $0x74] sm:$0xf]
    %v366 = vld [vmem:[#allocation7 + $0x78] sm:$0xff]
    %v367 = vld [vmem:[#allocation7 + $0x80] sm:$0xf]
    %v368 = vld [vmem:[#allocation7 + $0x84] sm:$0xff]
    %v369 = vld [vmem:[#allocation7 + $0x8c] sm:$0xf]
    %v370 = vld [vmem:[#allocation7 + $0x90] sm:$0xff]
    %v371 = vld [vmem:[#allocation7 + $0x98] sm:$0xf]
    %v372 = vld [vmem:[#allocation7 + $0x9c] sm:$0xff]
    %v373 = vld [vmem:[#allocation7 + $0xa4] sm:$0xf]
    %v374 = vld [vmem:[#allocation7 + $0xa8] sm:$0xff]
    %v375 = vld [vmem:[#allocation7 + $0xb0] sm:$0xf]
    %v376 = vld [vmem:[#allocation7 + $0xb4] sm:$0xff]
    %v377 = vld [vmem:[#allocation7 + $0xbc] sm:$0xf]
    %v378 = vld [vmem:[#allocation7 + $0xc0] sm:$0xff]
    %v379 = vld [vmem:[#allocation7 + $0xc8] sm:$0xf]
    %v380 = vld [vmem:[#allocation7 + $0xcc] sm:$0xff]
    %v381 = vld [vmem:[#allocation7 + $0xd4] sm:$0xf]
    %v382 = vld [vmem:[#allocation7 + $0xd8] sm:$0xff]
    %v383 = vld [vmem:[#allocation7 + $0xe0] sm:$0xf]
    %v384 = vld [vmem:[#allocation7 + $0xe4] sm:$0xff]
    %v385 = vld [vmem:[#allocation7 + $0xec] sm:$0xf]
    %v386 = vld [vmem:[#allocation7 + $0xf0] sm:$0xff]
    %v387 = vld [vmem:[#allocation7 + $0xf8] sm:$0xf]
    %v388 = vld [vmem:[#allocation7 + $0xfc] sm:$0xff]
    %v389 = vld [vmem:[#allocation7 + $0x104] sm:$0xf]
    %v390 = vld [vmem:[#allocation7 + $0x108] sm:$0xff]
    %v391 = vld [vmem:[#allocation7 + $0x110] sm:$0xf]
    %v392 = vld [vmem:[#allocation7 + $0x114] sm:$0xff]
    %v393 = vld [vmem:[#allocation7 + $0x11c] sm:$0xf]
    %v394 = vld [vmem:[#allocation7 + $0x120] sm:$0xff]
    %v395 = vld [vmem:[#allocation7 + $0x128] sm:$0xf]
    %v396 = vld [vmem:[#allocation7 + $0x12c] sm:$0xff]
    %v397 = vld [vmem:[#allocation7 + $0x134] sm:$0xf]
    %v398 = vld [vmem:[#allocation7 + $0x138] sm:$0xff]
    %v399 = vld [vmem:[#allocation7 + $0x140] sm:$0xf]
    %v400 = vld [vmem:[#allocation7 + $0x144] sm:$0xff]
    %v401 = vld [vmem:[#allocation7 + $0x14c] sm:$0xf]
    %v402 = vld [vmem:[#allocation7 + $0x150] sm:$0xff]
    %v403 = vld [vmem:[#allocation7 + $0x158] sm:$0xf]
    %v404 = vld [vmem:[#allocation7 + $0x15c] sm:$0xff]
    %v405 = vld [vmem:[#allocation7 + $0x164] sm:$0xf]
    %v406 = vld [vmem:[#allocation7 + $0x168] sm:$0xff]
    %v407 = vld [vmem:[#allocation7 + $0x170] sm:$0xf]
    %v408 = vld [vmem:[#allocation7 + $0x174] sm:$0xff]
    %v409 = vld [vmem:[#allocation7 + $0x17c] sm:$0xf]
    %v410 = vld [vmem:[#allocation7 + $0x180] sm:$0xff]
    %v411 = vld [vmem:[#allocation7 + $0x188] sm:$0xf]
    %v412 = vld [vmem:[#allocation7 + $0x18c] sm:$0xff]
    %v413 = vld [vmem:[#allocation7 + $0x194] sm:$0xf]
    %v414 = vld [vmem:[#allocation7 + $0x198] sm:$0xff]
    %v415 = vld [vmem:[#allocation7 + $0x1a0] sm:$0xf]
    %v416 = vld [vmem:[#allocation7 + $0x1a4] sm:$0xff]
    %v417 = vld [vmem:[#allocation7 + $0x1ac] sm:$0xf]
    %v418 = vld [vmem:[#allocation7 + $0x1b0] sm:$0xff]
    %v419 = vld [vmem:[#allocation7 + $0x1b8] sm:$0xf]
    %v420 = vld [vmem:[#allocation7 + $0x1bc] sm:$0xff]
    %v421 = vld [vmem:[#allocation7 + $0x1c4] sm:$0xf]
    %v422 = vld [vmem:[#allocation7 + $0x1c8] sm:$0xff]
    %v423 = vld [vmem:[#allocation7 + $0x1d0] sm:$0xf]
    %v424 = vld [vmem:[#allocation7 + $0x1d4] sm:$0xff]
    %v425 = vld [vmem:[#allocation7 + $0x1dc] sm:$0xf]
    %v426 = vld [vmem:[#allocation7 + $0x1e0] sm:$0xff]
    %v427 = vld [vmem:[#allocation7 + $0x1e8] sm:$0xf]
    %v428 = vld [vmem:[#allocation7 + $0x1ec] sm:$0xff]
    %v429 = vld [vmem:[#allocation7 + $0x1f4] sm:$0xf]
    %v430 = vld [vmem:[#allocation7 + $0x1f8] sm:$0xff]
    %v431 = vld [vmem:[#allocation7 + $0x200] sm:$0xf]
    %v432 = vld [vmem:[#allocation7 + $0x204] sm:$0xff]
    %v433 = vld [vmem:[#allocation7 + $0x20c] sm:$0xf]
    %v434 = vld [vmem:[#allocation7 + $0x210] sm:$0xff]
    %v435 = vld [vmem:[#allocation7 + $0x218] sm:$0xf]
    %v436 = vld [vmem:[#allocation7 + $0x21c] sm:$0xff]
    %v437 = vld [vmem:[#allocation7 + $0x224] sm:$0xf]
    %v438 = vld [vmem:[#allocation7 + $0x228] sm:$0xff]
    %v439 = vld [vmem:[#allocation7 + $0x230] sm:$0xf]
    %v440 = vld [vmem:[#allocation7 + $0x234] sm:$0xff]
    %v441 = vld [vmem:[#allocation7 + $0x23c] sm:$0xf]
    %v442 = vld [vmem:[%s4] sm:$0x7]
    %v444 = vlaneseq
    %v445 = vshrl.u32 %v444, 7
    %v446 = vsub.s32 0, %v445
    %v447 = vrot.slane %v442, %v446
    %v448 = vlaneseq
    %v449 = vshrl.u32 %v448, 7
    %v450 = vsub.s32 1, %v449
    %v451 = vrot.slane %v442, %v450
    %v452 = vlaneseq
    %v453 = vshrl.u32 %v452, 7
    %v454 = vsub.s32 2, %v453
    %v455 = vrot.slane %v442, %v454
    %v555 = vunpack.c.l.b16 %v346
    %v556 = vunpack.c.h.b16 %v346
    %v557 = vunpack.c.l.b16 %v347
    %v558 = vunpack.c.l.b16 %v348
    %v559 = vunpack.c.h.b16 %v348
    %v560 = vunpack.c.l.b16 %v349
    %v561 = vunpack.c.l.b16 %v350
    %v562 = vunpack.c.h.b16 %v350
    %v563 = vunpack.c.l.b16 %v351
    %v564 = vunpack.c.l.b16 %v352
    %v565 = vunpack.c.h.b16 %v352
    %v566 = vunpack.c.l.b16 %v353
    %v567 = vunpack.c.l.b16 %v354
    %v568 = vunpack.c.h.b16 %v354
    %v569 = vunpack.c.l.b16 %v355
    %v570 = vunpack.c.l.b16 %v356
    %v571 = vunpack.c.h.b16 %v356
    %v572 = vunpack.c.l.b16 %v357
    %v573 = vunpack.c.l.b16 %v358
    %v574 = vunpack.c.h.b16 %v358
    %v575 = vunpack.c.l.b16 %v359
    %v576 = vunpack.c.l.b16 %v360
    %v577 = vunpack.c.h.b16 %v360
    %v578 = vunpack.c.l.b16 %v361
    %v579 = vunpack.c.l.b16 %v362
    %v580 = vunpack.c.h.b16 %v362
    %v581 = vunpack.c.l.b16 %v363
    %v582 = vunpack.c.l.b16 %v364
    %v583 = vunpack.c.h.b16 %v364
    %v584 = vunpack.c.l.b16 %v365
    %v585 = vunpack.c.l.b16 %v366
    %v586 = vunpack.c.h.b16 %v366
    %v587 = vunpack.c.l.b16 %v367
    %v588 = vunpack.c.l.b16 %v368
    %v589 = vunpack.c.h.b16 %v368
    %v590 = vunpack.c.l.b16 %v369
    %v591 = vunpack.c.l.b16 %v370
    %v592 = vunpack.c.h.b16 %v370
    %v593 = vunpack.c.l.b16 %v371
    %v594 = vunpack.c.l.b16 %v372
    %v595 = vunpack.c.h.b16 %v372
    %v596 = vunpack.c.l.b16 %v373
    %v597 = vunpack.c.l.b16 %v374
    %v598 = vunpack.c.h.b16 %v374
    %v599 = vunpack.c.l.b16 %v375
    %v600 = vunpack.c.l.b16 %v376
    %v601 = vunpack.c.h.b16 %v376
    %v602 = vunpack.c.l.b16 %v377
    %v603 = vunpack.c.l.b16 %v378
    %v604 = vunpack.c.h.b16 %v378
    %v605 = vunpack.c.l.b16 %v379
    %v606 = vunpack.c.l.b16 %v380
    %v607 = vunpack.c.h.b16 %v380
    %v608 = vunpack.c.l.b16 %v381
    %v609 = vunpack.c.l.b16 %v382
    %v610 = vunpack.c.h.b16 %v382
    %v611 = vunpack.c.l.b16 %v383
    %v612 = vunpack.c.l.b16 %v384
    %v613 = vunpack.c.h.b16 %v384
    %v614 = vunpack.c.l.b16 %v385
    %v615 = vunpack.c.l.b16 %v386
    %v616 = vunpack.c.h.b16 %v386
    %v617 = vunpack.c.l.b16 %v387
    %v618 = vunpack.c.l.b16 %v388
    %v619 = vunpack.c.h.b16 %v388
    %v620 = vunpack.c.l.b16 %v389
    %v621 = vunpack.c.l.b16 %v390
    %v622 = vunpack.c.h.b16 %v390
    %v623 = vunpack.c.l.b16 %v391
    %v624 = vunpack.c.l.b16 %v392
    %v625 = vunpack.c.h.b16 %v392
    %v626 = vunpack.c.l.b16 %v393
    %v627 = vunpack.c.l.b16 %v394
    %v628 = vunpack.c.h.b16 %v394
    %v629 = vunpack.c.l.b16 %v395
    %v630 = vunpack.c.l.b16 %v396
    %v631 = vunpack.c.h.b16 %v396
    %v632 = vunpack.c.l.b16 %v397
    %v633 = vunpack.c.l.b16 %v398
    %v634 = vunpack.c.h.b16 %v398
    %v635 = vunpack.c.l.b16 %v399
    %v636 = vunpack.c.l.b16 %v400
    %v637 = vunpack.c.h.b16 %v400
    %v638 = vunpack.c.l.b16 %v401
    %v639 = vunpack.c.l.b16 %v402
    %v640 = vunpack.c.h.b16 %v402
    %v641 = vunpack.c.l.b16 %v403
    %v642 = vunpack.c.l.b16 %v404
    %v643 = vunpack.c.h.b16 %v404
    %v644 = vunpack.c.l.b16 %v405
    %v645 = vunpack.c.l.b16 %v406
    %v646 = vunpack.c.h.b16 %v406
    %v647 = vunpack.c.l.b16 %v407
    %v648 = vunpack.c.l.b16 %v408
    %v649 = vunpack.c.h.b16 %v408
    %v650 = vunpack.c.l.b16 %v409
    %v651 = vunpack.c.l.b16 %v410
    %v652 = vunpack.c.h.b16 %v410
    %v653 = vunpack.c.l.b16 %v411
    %v654 = vunpack.c.l.b16 %v412
    %v655 = vunpack.c.h.b16 %v412
    %v656 = vunpack.c.l.b16 %v413
    %v657 = vunpack.c.l.b16 %v414
    %v658 = vunpack.c.h.b16 %v414
    %v659 = vunpack.c.l.b16 %v415
    %v660 = vunpack.c.l.b16 %v416
    %v661 = vunpack.c.h.b16 %v416
    %v662 = vunpack.c.l.b16 %v417
    %v663 = vunpack.c.l.b16 %v418
    %v664 = vunpack.c.h.b16 %v418
    %v665 = vunpack.c.l.b16 %v419
    %v666 = vunpack.c.l.b16 %v420
    %v667 = vunpack.c.h.b16 %v420
    %v668 = vunpack.c.l.b16 %v421
    %v669 = vunpack.c.l.b16 %v422
    %v670 = vunpack.c.h.b16 %v422
    %v671 = vunpack.c.l.b16 %v423
    %v672 = vunpack.c.l.b16 %v424
    %v673 = vunpack.c.h.b16 %v424
    %v674 = vunpack.c.l.b16 %v425
    %v675 = vunpack.c.l.b16 %v426
    %v676 = vunpack.c.h.b16 %v426
    %v677 = vunpack.c.l.b16 %v427
    %v678 = vunpack.c.l.b16 %v428
    %v679 = vunpack.c.h.b16 %v428
    %v680 = vunpack.c.l.b16 %v429
    %v681 = vunpack.c.l.b16 %v430
    %v682 = vunpack.c.h.b16 %v430
    %v683 = vunpack.c.l.b16 %v431
    %v684 = vunpack.c.l.b16 %v432
    %v685 = vunpack.c.h.b16 %v432
    %v686 = vunpack.c.l.b16 %v433
    %v687 = vunpack.c.l.b16 %v434
    %v688 = vunpack.c.h.b16 %v434
    %v689 = vunpack.c.l.b16 %v435
    %v690 = vunpack.c.l.b16 %v436
    %v691 = vunpack.c.h.b16 %v436
    %v692 = vunpack.c.l.b16 %v437
    %v693 = vunpack.c.l.b16 %v438
    %v694 = vunpack.c.h.b16 %v438
    %v695 = vunpack.c.l.b16 %v439
    %v696 = vunpack.c.l.b16 %v440
    %v697 = vunpack.c.h.b16 %v440
    %v698 = vunpack.c.l.b16 %v441
    %v699 = vpack.c.b16 %v558, %v555
    %v700 = vpack.c.b16 %v559, %v556
    %v701 = vpack.c.b16 %v560, %v557
    %v702 = vpack.c.b16 %v564, %v561
    %v703 = vpack.c.b16 %v565, %v562
    %v704 = vpack.c.b16 %v566, %v563
    %v705 = vpack.c.b16 %v570, %v567
    %v706 = vpack.c.b16 %v571, %v568
    %v707 = vpack.c.b16 %v572, %v569
    %v708 = vpack.c.b16 %v576, %v573
    %v709 = vpack.c.b16 %v577, %v574
    %v710 = vpack.c.b16 %v578, %v575
    %v711 = vpack.c.b16 %v582, %v579
    %v712 = vpack.c.b16 %v583, %v580
    %v713 = vpack.c.b16 %v584, %v581
    %v714 = vpack.c.b16 %v588, %v585
    %v715 = vpack.c.b16 %v589, %v586
    %v716 = vpack.c.b16 %v590, %v587
    %v717 = vpack.c.b16 %v594, %v591
    %v718 = vpack.c.b16 %v595, %v592
    %v719 = vpack.c.b16 %v596, %v593
    %v720 = vpack.c.b16 %v600, %v597
    %v721 = vpack.c.b16 %v601, %v598
    %v722 = vpack.c.b16 %v602, %v599
    %v723 = vpack.c.b16 %v606, %v603
    %v724 = vpack.c.b16 %v607, %v604
    %v725 = vpack.c.b16 %v608, %v605
    %v726 = vpack.c.b16 %v612, %v609
    %v727 = vpack.c.b16 %v613, %v610
    %v728 = vpack.c.b16 %v614, %v611
    %v729 = vpack.c.b16 %v618, %v615
    %v730 = vpack.c.b16 %v619, %v616
    %v731 = vpack.c.b16 %v620, %v617
    %v732 = vpack.c.b16 %v624, %v621
    %v733 = vpack.c.b16 %v625, %v622
    %v734 = vpack.c.b16 %v626, %v623
    %v735 = vpack.c.b16 %v630, %v627
    %v736 = vpack.c.b16 %v631, %v628
    %v737 = vpack.c.b16 %v632, %v629
    %v738 = vpack.c.b16 %v636, %v633
    %v739 = vpack.c.b16 %v637, %v634
    %v740 = vpack.c.b16 %v638, %v635
    %v741 = vpack.c.b16 %v642, %v639
    %v742 = vpack.c.b16 %v643, %v640
    %v743 = vpack.c.b16 %v644, %v641
    %v744 = vpack.c.b16 %v648, %v645
    %v745 = vpack.c.b16 %v649, %v646
    %v746 = vpack.c.b16 %v650, %v647
    %v747 = vpack.c.b16 %v654, %v651
    %v748 = vpack.c.b16 %v655, %v652
    %v749 = vpack.c.b16 %v656, %v653
    %v750 = vpack.c.b16 %v660, %v657
    %v751 = vpack.c.b16 %v661, %v658
    %v752 = vpack.c.b16 %v662, %v659
    %v753 = vpack.c.b16 %v666, %v663
    %v754 = vpack.c.b16 %v667, %v664
    %v755 = vpack.c.b16 %v668, %v665
    %v756 = vpack.c.b16 %v672, %v669
    %v757 = vpack.c.b16 %v673, %v670
    %v758 = vpack.c.b16 %v674, %v671
    %v759 = vpack.c.b16 %v678, %v675
    %v760 = vpack.c.b16 %v679, %v676
    %v761 = vpack.c.b16 %v680, %v677
    %v762 = vpack.c.b16 %v684, %v681
    %v763 = vpack.c.b16 %v685, %v682
    %v764 = vpack.c.b16 %v686, %v683
    %v765 = vpack.c.b16 %v690, %v687
    %v766 = vpack.c.b16 %v691, %v688
    %v767 = vpack.c.b16 %v692, %v689
    %v768 = vpack.c.b16 %v696, %v693
    %v769 = vpack.c.b16 %v697, %v694
    %v770 = vpack.c.b16 %v698, %v695
    %843 = vmatprep.subr.bf16.mxu0 %v700
    %844 = vmatpush1.bf16.msra.mxu0 %v699
    %845 = vmatprep.subr.bf16.mxu0 %v703
    %846 = vmatpush1.bf16.msra.mxu0 %v702
    %847 = vmatprep.subr.bf16.mxu0 %v706
    %848 = vmatpush1.bf16.msra.mxu0 %v705
    %849 = vmatprep.subr.bf16.mxu0 %v709
    %850 = vmatpush1.bf16.msra.mxu0 %v708
    %851 = vmatprep.subr.bf16.mxu0 %v712
    %852 = vmatpush1.bf16.msra.mxu0 %v711
    %853 = vmatprep.subr.bf16.mxu0 %v715
    %854 = vmatpush1.bf16.msra.mxu0 %v714
    %855 = vmatprep.subr.bf16.mxu0 %v718
    %856 = vmatpush1.bf16.msra.mxu0 %v717
    %857 = vmatprep.subr.bf16.mxu0 %v721
    %858 = vmatpush1.bf16.msra.mxu0 %v720
    %859 = vmatprep.subr.bf16.mxu0 %v724
    %860 = vmatpush1.bf16.msra.mxu0 %v723
    %861 = vmatprep.subr.bf16.mxu0 %v727
    %862 = vmatpush1.bf16.msra.mxu0 %v726
    %863 = vmatprep.subr.bf16.mxu0 %v730
    %864 = vmatpush1.bf16.msra.mxu0 %v729
    %865 = vmatprep.subr.bf16.mxu0 %v733
    %866 = vmatpush1.bf16.msra.mxu0 %v732
    %867 = vmatprep.subr.bf16.mxu0 %v736
    %868 = vmatpush1.bf16.msra.mxu0 %v735
    %869 = vmatprep.subr.bf16.mxu0 %v739
    %870 = vmatpush1.bf16.msra.mxu0 %v738
    %871 = vmatprep.subr.bf16.mxu0 %v742
    %872 = vmatpush1.bf16.msra.mxu0 %v741
    %873 = vmatprep.subr.bf16.mxu0 %v745
    %874 = vmatpush1.bf16.msra.mxu0 %v744
    %875 = vmatprep.mubr.bf16.mxu0 %v344
    %876 = vmatmul.mubr.bf16.gmra.mrb[0].mxu0 %v343
    %v877 = vpop.f32.mrb[0].mxu0
    %v878 = vadd.f32 %v447, %v877
    %v879 = vpop.f32.mrb[0].mxu0
    %v880 = vadd.f32 %v451, %v879
    %v881 = vpop.f32.mrb[0].mxu0
    %v882 = vpop.f32.mrb[0].mxu0
    %883 = vdwg.mxu0
    %884 = vmatprep.subr.bf16.mxu0 %v748
    %885 = vmatpush1.bf16.msra.mxu0 %v747
    %886 = vmatprep.subr.bf16.mxu0 %v751
    %887 = vmatpush1.bf16.msra.mxu0 %v750
    %888 = vmatprep.subr.bf16.mxu0 %v754
    %889 = vmatpush1.bf16.msra.mxu0 %v753
    %890 = vmatprep.subr.bf16.mxu0 %v757
    %891 = vmatpush1.bf16.msra.mxu0 %v756
    %892 = vmatprep.subr.bf16.mxu0 %v760
    %893 = vmatpush1.bf16.msra.mxu0 %v759
    %894 = vmatprep.subr.bf16.mxu0 %v763
    %895 = vmatpush1.bf16.msra.mxu0 %v762
    %896 = vmatprep.subr.bf16.mxu0 %v766
    %897 = vmatpush1.bf16.msra.mxu0 %v765
    %898 = vmatprep.subr.bf16.mxu0 %v769
    %899 = vmatpush1.bf16.msra.mxu0 %v768
    %900 = vmatprep.subr.bf16.mxu0 0
    %901 = vmatpush1.bf16.msra.mxu0 0
    %902 = vmatprep.subr.bf16.mxu0 0
    %903 = vmatpush1.bf16.msra.mxu0 0
    %904 = vmatprep.subr.bf16.mxu0 0
    %905 = vmatpush1.bf16.msra.mxu0 0
    %906 = vmatprep.subr.bf16.mxu0 0
    %907 = vmatpush1.bf16.msra.mxu0 0
    %908 = vmatprep.subr.bf16.mxu0 0
    %909 = vmatpush1.bf16.msra.mxu0 0
    %910 = vmatprep.subr.bf16.mxu0 0
    %911 = vmatpush1.bf16.msra.mxu0 0
    %912 = vmatprep.subr.bf16.mxu0 0
    %913 = vmatpush1.bf16.msra.mxu0 0
    %914 = vmatprep.subr.bf16.mxu0 0
    %915 = vmatpush1.bf16.msra.mxu0 0
    %916 = vmatprep.mubr.bf16.mxu0 0
    %917 = vmatmul.mubr.bf16.gmra.mrb[0].mxu0 %v345
    %v918 = vpop.f32.mrb[0].mxu0
    %v919 = vadd.f32 %v878, %v918
    %v920 = vpop.f32.mrb[0].mxu0
    %v921 = vadd.f32 %v880, %v920
    %v922 = vpop.f32.mrb[0].mxu0
    %v923 = vpop.f32.mrb[0].mxu0
    %924 = vdwg.mxu0
    %925 = vmatprep.subr.bf16.mxu0 0
    %926 = vmatpush1.bf16.msra.mxu0 %v701
    %927 = vmatprep.subr.bf16.mxu0 0
    %928 = vmatpush1.bf16.msra.mxu0 %v704
    %929 = vmatprep.subr.bf16.mxu0 0
    %930 = vmatpush1.bf16.msra.mxu0 %v707
    %931 = vmatprep.subr.bf16.mxu0 0
    %932 = vmatpush1.bf16.msra.mxu0 %v710
    %933 = vmatprep.subr.bf16.mxu0 0
    %934 = vmatpush1.bf16.msra.mxu0 %v713
    %935 = vmatprep.subr.bf16.mxu0 0
    %936 = vmatpush1.bf16.msra.mxu0 %v716
    %937 = vmatprep.subr.bf16.mxu0 0
    %938 = vmatpush1.bf16.msra.mxu0 %v719
    %939 = vmatprep.subr.bf16.mxu0 0
    %940 = vmatpush1.bf16.msra.mxu0 %v722
    %941 = vmatprep.subr.bf16.mxu0 0
    %942 = vmatpush1.bf16.msra.mxu0 %v725
    %943 = vmatprep.subr.bf16.mxu0 0
    %944 = vmatpush1.bf16.msra.mxu0 %v728
    %945 = vmatprep.subr.bf16.mxu0 0
    %946 = vmatpush1.bf16.msra.mxu0 %v731
    %947 = vmatprep.subr.bf16.mxu0 0
    %948 = vmatpush1.bf16.msra.mxu0 %v734
    %949 = vmatprep.subr.bf16.mxu0 0
    %950 = vmatpush1.bf16.msra.mxu0 %v737
    %951 = vmatprep.subr.bf16.mxu0 0
    %952 = vmatpush1.bf16.msra.mxu0 %v740
    %953 = vmatprep.subr.bf16.mxu0 0
    %954 = vmatpush1.bf16.msra.mxu0 %v743
    %955 = vmatprep.subr.bf16.mxu0 0
    %956 = vmatpush1.bf16.msra.mxu0 %v746
    %957 = vmatprep.mubr.bf16.mxu0 %v344
    %958 = vmatmul.mubr.bf16.gmra.mrb[0].mxu0 %v343
    %v959 = vpop.f32.mrb[0].mxu0
    %v960 = vadd.f32 %v455, %v959
    %v961 = vpop.f32.mrb[0].mxu0
    %v962 = vpop.f32.mrb[0].mxu0
    %v963 = vpop.f32.mrb[0].mxu0
    %964 = vdwg.mxu0
    %965 = vmatprep.subr.bf16.mxu0 0
    %966 = vmatpush1.bf16.msra.mxu0 %v749
    %967 = vmatprep.subr.bf16.mxu0 0
    %968 = vmatpush1.bf16.msra.mxu0 %v752
    %969 = vmatprep.subr.bf16.mxu0 0
    %970 = vmatpush1.bf16.msra.mxu0 %v755
    %971 = vmatprep.subr.bf16.mxu0 0
    %972 = vmatpush1.bf16.msra.mxu0 %v758
    %973 = vmatprep.subr.bf16.mxu0 0
    %974 = vmatpush1.bf16.msra.mxu0 %v761
    %975 = vmatprep.subr.bf16.mxu0 0
    %976 = vmatpush1.bf16.msra.mxu0 %v764
    %977 = vmatprep.subr.bf16.mxu0 0
    %978 = vmatpush1.bf16.msra.mxu0 %v767
    %979 = vmatprep.subr.bf16.mxu0 0
    %980 = vmatpush1.bf16.msra.mxu0 %v770
    %981 = vmatprep.subr.bf16.mxu0 0
    %982 = vmatpush1.bf16.msra.mxu0 0
    %983 = vmatprep.subr.bf16.mxu0 0
    %984 = vmatpush1.bf16.msra.mxu0 0
    %985 = vmatprep.subr.bf16.mxu0 0
    %986 = vmatpush1.bf16.msra.mxu0 0
    %987 = vmatprep.subr.bf16.mxu0 0
    %988 = vmatpush1.bf16.msra.mxu0 0
    %989 = vmatprep.subr.bf16.mxu0 0
    %990 = vmatpush1.bf16.msra.mxu0 0
    %991 = vmatprep.subr.bf16.mxu0 0
    %992 = vmatpush1.bf16.msra.mxu0 0
    %993 = vmatprep.subr.bf16.mxu0 0
    %994 = vmatpush1.bf16.msra.mxu0 0
    %995 = vmatprep.subr.bf16.mxu0 0
    %996 = vmatpush1.bf16.msra.mxu0 0
    %997 = vmatprep.mubr.bf16.mxu0 0
    %998 = vmatmul.mubr.bf16.gmra.mrb[0].mxu0 %v345
    %v999 = vpop.f32.mrb[0].mxu0
    %v1000 = vadd.f32 %v960, %v999
    %v1001 = vpop.f32.mrb[0].mxu0
    %v1002 = vpop.f32.mrb[0].mxu0
    %v1003 = vpop.f32.mrb[0].mxu0
    %1004 = vdwg.mxu0
    %v1005 = vmax.f32 %v919, 0.0
    %v1006 = vmax.f32 %v921, 0.0
    %v1007 = vmax.f32 %v1000, 0.0
    %v1008 = vpack.c.bf16 %v1005, %v1005
    %v1009 = vpack.c.bf16 %v1006, %v1006
    %v1010 = vpack.c.bf16 %v1007, %v1007
    %v1011 = vld [vmem:[#allocation8] sm:$0xf]
    %v1012 = vld [vmem:[#allocation8 + $0x4] sm:$0xf]
    %v1013 = vld [vmem:[#allocation8 + $0x8] sm:$0xf]
    %v1014 = vld [vmem:[#allocation8 + $0xc] sm:$0xf]
    %v1015 = vld [vmem:[#allocation8 + $0x10] sm:$0xf]
    %v1016 = vld [vmem:[#allocation8 + $0x14] sm:$0xf]
    %v1017 = vld [vmem:[#allocation8 + $0x18] sm:$0xf]
    %v1018 = vld [vmem:[#allocation8 + $0x1c] sm:$0xf]
    %v1019 = vld [vmem:[#allocation8 + $0x20] sm:$0xf]
    %v1020 = vld [vmem:[#allocation8 + $0x24] sm:$0xf]
    %v1021 = vld [vmem:[#allocation8 + $0x28] sm:$0xf]
    %v1022 = vld [vmem:[#allocation8 + $0x2c] sm:$0xf]
    %v1023 = vld [vmem:[#allocation8 + $0x30] sm:$0xf]
    %v1024 = vld [vmem:[#allocation8 + $0x34] sm:$0xf]
    %v1025 = vld [vmem:[#allocation8 + $0x38] sm:$0xf]
    %v1026 = vld [vmem:[#allocation8 + $0x3c] sm:$0xf]
    %v1027 = vld [vmem:[#allocation8 + $0x40] sm:$0xf]
    %v1028 = vld [vmem:[#allocation8 + $0x44] sm:$0xf]
    %v1029 = vld [vmem:[#allocation8 + $0x48] sm:$0xf]
    %v1030 = vld [vmem:[#allocation8 + $0x4c] sm:$0xf]
    %v1031 = vld [vmem:[#allocation8 + $0x50] sm:$0xf]
    %v1032 = vld [vmem:[#allocation8 + $0x54] sm:$0xf]
    %v1033 = vld [vmem:[#allocation8 + $0x58] sm:$0xf]
    %v1034 = vld [vmem:[#allocation8 + $0x5c] sm:$0xf]
    %v1035 = vld [vmem:[#allocation8 + $0x60] sm:$0xf]
    %v1036 = vld [vmem:[#allocation8 + $0x64] sm:$0xf]
    %v1037 = vld [vmem:[#allocation8 + $0x68] sm:$0xf]
    %v1038 = vld [vmem:[#allocation8 + $0x6c] sm:$0xf]
    %v1039 = vld [vmem:[#allocation8 + $0x70] sm:$0xf]
    %v1040 = vld [vmem:[#allocation8 + $0x74] sm:$0xf]
    %v1041 = vld [vmem:[#allocation8 + $0x78] sm:$0xf]
    %v1042 = vld [vmem:[#allocation8 + $0x7c] sm:$0xf]
    %v1043 = vld [vmem:[#allocation8 + $0x80] sm:$0xf]
    %v1044 = vld [vmem:[#allocation8 + $0x84] sm:$0xf]
    %v1045 = vld [vmem:[#allocation8 + $0x88] sm:$0xf]
    %v1046 = vld [vmem:[#allocation8 + $0x8c] sm:$0xf]
    %v1047 = vld [vmem:[#allocation8 + $0x90] sm:$0xf]
    %v1048 = vld [vmem:[#allocation8 + $0x94] sm:$0xf]
    %v1049 = vld [vmem:[#allocation8 + $0x98] sm:$0xf]
    %v1050 = vld [vmem:[#allocation8 + $0x9c] sm:$0xf]
    %v1051 = vld [vmem:[#allocation8 + $0xa0] sm:$0xf]
    %v1052 = vld [vmem:[#allocation8 + $0xa4] sm:$0xf]
    %v1053 = vld [vmem:[#allocation8 + $0xa8] sm:$0xf]
    %v1054 = vld [vmem:[#allocation8 + $0xac] sm:$0xf]
    %v1055 = vld [vmem:[#allocation8 + $0xb0] sm:$0xf]
    %v1056 = vld [vmem:[#allocation8 + $0xb4] sm:$0xf]
    %v1057 = vld [vmem:[#allocation8 + $0xb8] sm:$0xf]
    %v1058 = vld [vmem:[#allocation8 + $0xbc] sm:$0xf]
    %v1059 = vld [vmem:[%s6] sm:$0x1]
    %v1061 = vlaneseq
    %v1062 = vshrl.u32 %v1061, 7
    %v1063 = vsub.s32 0, %v1062
    %v1064 = vrot.slane %v1059, %v1063
    %v1114 = vunpack.c.l.b16 %v1011
    %v1115 = vunpack.c.l.b16 %v1012
    %v1116 = vunpack.c.l.b16 %v1013
    %v1117 = vunpack.c.l.b16 %v1014
    %v1118 = vunpack.c.l.b16 %v1015
    %v1119 = vunpack.c.l.b16 %v1016
    %v1120 = vunpack.c.l.b16 %v1017
    %v1121 = vunpack.c.l.b16 %v1018
    %v1122 = vunpack.c.l.b16 %v1019
    %v1123 = vunpack.c.l.b16 %v1020
    %v1124 = vunpack.c.l.b16 %v1021
    %v1125 = vunpack.c.l.b16 %v1022
    %v1126 = vunpack.c.l.b16 %v1023
    %v1127 = vunpack.c.l.b16 %v1024
    %v1128 = vunpack.c.l.b16 %v1025
    %v1129 = vunpack.c.l.b16 %v1026
    %v1130 = vunpack.c.l.b16 %v1027
    %v1131 = vunpack.c.l.b16 %v1028
    %v1132 = vunpack.c.l.b16 %v1029
    %v1133 = vunpack.c.l.b16 %v1030
    %v1134 = vunpack.c.l.b16 %v1031
    %v1135 = vunpack.c.l.b16 %v1032
    %v1136 = vunpack.c.l.b16 %v1033
    %v1137 = vunpack.c.l.b16 %v1034
    %v1138 = vunpack.c.l.b16 %v1035
    %v1139 = vunpack.c.l.b16 %v1036
    %v1140 = vunpack.c.l.b16 %v1037
    %v1141 = vunpack.c.l.b16 %v1038
    %v1142 = vunpack.c.l.b16 %v1039
    %v1143 = vunpack.c.l.b16 %v1040
    %v1144 = vunpack.c.l.b16 %v1041
    %v1145 = vunpack.c.l.b16 %v1042
    %v1146 = vunpack.c.l.b16 %v1043
    %v1147 = vunpack.c.l.b16 %v1044
    %v1148 = vunpack.c.l.b16 %v1045
    %v1149 = vunpack.c.l.b16 %v1046
    %v1150 = vunpack.c.l.b16 %v1047
    %v1151 = vunpack.c.l.b16 %v1048
    %v1152 = vunpack.c.l.b16 %v1049
    %v1153 = vunpack.c.l.b16 %v1050
    %v1154 = vunpack.c.l.b16 %v1051
    %v1155 = vunpack.c.l.b16 %v1052
    %v1156 = vunpack.c.l.b16 %v1053
    %v1157 = vunpack.c.l.b16 %v1054
    %v1158 = vunpack.c.l.b16 %v1055
    %v1159 = vunpack.c.l.b16 %v1056
    %v1160 = vunpack.c.l.b16 %v1057
    %v1161 = vunpack.c.l.b16 %v1058
    %v1162 = vpack.c.b16 %v1115, %v1114
    %v1163 = vpack.c.b16 %v1117, %v1116
    %v1164 = vpack.c.b16 %v1119, %v1118
    %v1165 = vpack.c.b16 %v1121, %v1120
    %v1166 = vpack.c.b16 %v1123, %v1122
    %v1167 = vpack.c.b16 %v1125, %v1124
    %v1168 = vpack.c.b16 %v1127, %v1126
    %v1169 = vpack.c.b16 %v1129, %v1128
    %v1170 = vpack.c.b16 %v1131, %v1130
    %v1171 = vpack.c.b16 %v1133, %v1132
    %v1172 = vpack.c.b16 %v1135, %v1134
    %v1173 = vpack.c.b16 %v1137, %v1136
    %v1174 = vpack.c.b16 %v1139, %v1138
    %v1175 = vpack.c.b16 %v1141, %v1140
    %v1176 = vpack.c.b16 %v1143, %v1142
    %v1177 = vpack.c.b16 %v1145, %v1144
    %v1178 = vpack.c.b16 %v1147, %v1146
    %v1179 = vpack.c.b16 %v1149, %v1148
    %v1180 = vpack.c.b16 %v1151, %v1150
    %v1181 = vpack.c.b16 %v1153, %v1152
    %v1182 = vpack.c.b16 %v1155, %v1154
    %v1183 = vpack.c.b16 %v1157, %v1156
    %v1184 = vpack.c.b16 %v1159, %v1158
    %v1185 = vpack.c.b16 %v1161, %v1160
    %1210 = vmatprep.subr.bf16.mxu0 0
    %1211 = vmatpush1.bf16.msra.mxu0 %v1162
    %1212 = vmatprep.subr.bf16.mxu0 0
    %1213 = vmatpush1.bf16.msra.mxu0 %v1163
    %1214 = vmatprep.subr.bf16.mxu0 0
    %1215 = vmatpush1.bf16.msra.mxu0 %v1164
    %1216 = vmatprep.subr.bf16.mxu0 0
    %1217 = vmatpush1.bf16.msra.mxu0 %v1165
    %1218 = vmatprep.subr.bf16.mxu0 0
    %1219 = vmatpush1.bf16.msra.mxu0 %v1166
    %1220 = vmatprep.subr.bf16.mxu0 0
    %1221 = vmatpush1.bf16.msra.mxu0 %v1167
    %1222 = vmatprep.subr.bf16.mxu0 0
    %1223 = vmatpush1.bf16.msra.mxu0 %v1168
    %1224 = vmatprep.subr.bf16.mxu0 0
    %1225 = vmatpush1.bf16.msra.mxu0 %v1169
    %1226 = vmatprep.subr.bf16.mxu0 0
    %1227 = vmatpush1.bf16.msra.mxu0 %v1170
    %1228 = vmatprep.subr.bf16.mxu0 0
    %1229 = vmatpush1.bf16.msra.mxu0 %v1171
    %1230 = vmatprep.subr.bf16.mxu0 0
    %1231 = vmatpush1.bf16.msra.mxu0 %v1172
    %1232 = vmatprep.subr.bf16.mxu0 0
    %1233 = vmatpush1.bf16.msra.mxu0 %v1173
    %1234 = vmatprep.subr.bf16.mxu0 0
    %1235 = vmatpush1.bf16.msra.mxu0 %v1174
    %1236 = vmatprep.subr.bf16.mxu0 0
    %1237 = vmatpush1.bf16.msra.mxu0 %v1175
    %1238 = vmatprep.subr.bf16.mxu0 0
    %1239 = vmatpush1.bf16.msra.mxu0 %v1176
    %1240 = vmatprep.subr.bf16.mxu0 0
    %1241 = vmatpush1.bf16.msra.mxu0 %v1177
    %1242 = vmatprep.mubr.bf16.mxu0 %v1009
    %1243 = vmatmul.mubr.bf16.gmra.mrb[0].mxu0 %v1008
    %v1244 = vpop.f32.mrb[0].mxu0
    %v1245 = vadd.f32 %v1064, %v1244
    %v1246 = vpop.f32.mrb[0].mxu0
    %v1247 = vpop.f32.mrb[0].mxu0
    %v1248 = vpop.f32.mrb[0].mxu0
    %1249 = vdwg.mxu0
    %1250 = vmatprep.subr.bf16.mxu0 0
    %1251 = vmatpush1.bf16.msra.mxu0 %v1178
    %1252 = vmatprep.subr.bf16.mxu0 0
    %1253 = vmatpush1.bf16.msra.mxu0 %v1179
    %1254 = vmatprep.subr.bf16.mxu0 0
    %1255 = vmatpush1.bf16.msra.mxu0 %v1180
    %1256 = vmatprep.subr.bf16.mxu0 0
    %1257 = vmatpush1.bf16.msra.mxu0 %v1181
    %1258 = vmatprep.subr.bf16.mxu0 0
    %1259 = vmatpush1.bf16.msra.mxu0 %v1182
    %1260 = vmatprep.subr.bf16.mxu0 0
    %1261 = vmatpush1.bf16.msra.mxu0 %v1183
    %1262 = vmatprep.subr.bf16.mxu0 0
    %1263 = vmatpush1.bf16.msra.mxu0 %v1184
    %1264 = vmatprep.subr.bf16.mxu0 0
    %1265 = vmatpush1.bf16.msra.mxu0 %v1185
    %1266 = vmatprep.subr.bf16.mxu0 0
    %1267 = vmatpush1.bf16.msra.mxu0 0
    %1268 = vmatprep.subr.bf16.mxu0 0
    %1269 = vmatpush1.bf16.msra.mxu0 0
    %1270 = vmatprep.subr.bf16.mxu0 0
    %1271 = vmatpush1.bf16.msra.mxu0 0
    %1272 = vmatprep.subr.bf16.mxu0 0
    %1273 = vmatpush1.bf16.msra.mxu0 0
    %1274 = vmatprep.subr.bf16.mxu0 0
    %1275 = vmatpush1.bf16.msra.mxu0 0
    %1276 = vmatprep.subr.bf16.mxu0 0
    %1277 = vmatpush1.bf16.msra.mxu0 0
    %1278 = vmatprep.subr.bf16.mxu0 0
    %1279 = vmatpush1.bf16.msra.mxu0 0
    %1280 = vmatprep.subr.bf16.mxu0 0
    %1281 = vmatpush1.bf16.msra.mxu0 0
    %1282 = vmatprep.mubr.bf16.mxu0 0
    %1283 = vmatmul.mubr.bf16.gmra.mrb[0].mxu0 %v1010
    %v1284 = vpop.f32.mrb[0].mxu0
    %v1285 = vadd.f32 %v1245, %v1284
    %v1286 = vpop.f32.mrb[0].mxu0
    %v1287 = vpop.f32.mrb[0].mxu0
    %v1288 = vpop.f32.mrb[0].mxu0
    %1289 = vdwg.mxu0
    %v1290 = vmax.f32 %v1285, 0.0
    %1291 = vst [vmem:[#allocation10] sm:$0xff] %v1290
    // Predicated region
    $region46: #{tpu_custom_call.1} parent=1 // pred_check
      _
    $region47: #{tpu_custom_call.1} parent=1 // pred_check_branch
      %1293 = sbr.rel (0) target = $region49
    $region48: #{tpu_custom_call.1} parent=1 // pred_region
      %s1295 = ssub.s32 128, 128
      %1296 = vsyncadd [#allocation4], %s1295
      %s1298 = sshll.u32 [#allocation10], 4
      %s1299 = int_to_ptr.vmem [resolvable:$true] %s1298
      %1301 = dma.vmem_to_hbm [thread:$0]  %s1299, 128, %s7, [#allocation4]
    $region49: #{tpu_custom_call.1} parent=1 // pred_fallthru
      _
    // Predicated region
    $region50: #{tpu_custom_call.1} parent=1 // pred_check
      _
    $region51: #{tpu_custom_call.1} parent=1 // pred_check_branch
      %1303 = sbr.rel (0) target = $region53
    $region52: #{tpu_custom_call.1} parent=1 // pred_region
      %1304 = dma.done [#allocation4], 128
    $region53: #{tpu_custom_call.1} parent=1 // pred_fallthru
      _
    %1305 = vsyncpa [#allocation3], 1
    %1306 = vsyncpa [#allocation6], 1
    %1307 = vsyncpa [#allocation9], 1
    %1308 = vsyncpa [#allocation4], 1

</llo_original>
